<compile_context>
chip_gen: v6e
topology: v6e:2x2x1
jax: 0.10.0
libtpu: 0.0.40
codegen_flags: <defaults>
</compile_context>

<pallas_src>
import jax
import jax.numpy as jnp
from jax.experimental import pallas as pl
from jax.experimental.pallas import tpu as pltpu


def _round_up(n: int, m: int) -> int:
    return ((n + m - 1) // m) * m


def _linear_kernel(x_ref, w_ref, b_ref, o_ref):
    # x_ref: (TM, D) VMEM; w_ref: (1, D) VMEM; b_ref: (1, 1) SMEM; o_ref: (TM, 1)
    x = x_ref[...].astype(jnp.float32)
    w = w_ref[...].astype(jnp.float32)
    # Single fused VPU multiply + XLU lane reduction (f32 accumulation).
    y = jnp.sum(x * w, axis=-1, keepdims=True)  # (TM, 1)
    o_ref[...] = (y + b_ref[0, 0]).astype(o_ref.dtype)


def _choose_tm(b_rows: int, d: int, itemsize: int, target_block_bytes: int) -> int:
    # Per-row VMEM cost: x row + lane-padded (128-wide) f32 output row.
    bytes_per_row = d * itemsize + 128 * 4
    tm = max(8, _round_up(max(target_block_bytes // bytes_per_row, 1), 8))
    tm = min(tm, _round_up(b_rows, 8))
    # Guarantee >= 2 grid steps when the batch allows it, so v7x's two
    # TensorCores both get work (negligible cost on single-TC chips).
    if tm >= b_rows and b_rows >= 16:
        tm = _round_up(pl.cdiv(b_rows, 2), 8)
    return tm


def linear_regression_forward(x, weight, bias, *, target_block_bytes: int = 6 << 20):
    """x: (B, D); weight: (1, D) (PyTorch nn.Linear layout); bias: (1,).

    Returns (B, 1), matching nn.Linear(input_dim, 1).
    """
    B, D = x.shape
    itemsize = jnp.dtype(x.dtype).itemsize

    # Tiny sublane-alignment pad only if B is not a multiple of 8 (never
    # triggers for 8-aligned batches; avoids the full pad-to-TM copy of x).
    B_eff = _round_up(B, 8)
    if B_eff != B:
        x = jnp.pad(x, ((0, B_eff - B), (0, 0)))

    TM = _choose_tm(B_eff, D, itemsize, target_block_bytes)
    grid = (pl.cdiv(B_eff, TM),)

    b2 = bias.reshape(1, 1).astype(jnp.float32)

    # Double-buffered x block + double-buffered lane-padded out block +
    # resident weight row, plus headroom.
    vmem_needed = (2 * TM * D * itemsize
                   + 2 * TM * 128 * 4
                   + 8 * _round_up(D, 128) * itemsize)
    vmem_limit = min(max(vmem_needed + (4 << 20), 16 << 20), 48 << 20)

    out = pl.pallas_call(
        _linear_kernel,
        out_shape=jax.ShapeDtypeStruct((B_eff, 1), x.dtype),
        grid_spec=pltpu.PrefetchScalarGridSpec(
            num_scalar_prefetch=0,
            grid=grid,
            in_specs=[
                # x: tiled over the batch axis -> auto double-buffered DMA.
                pl.BlockSpec((TM, D), lambda i: (i, 0)),
                # weight: lane-dense (1, D) block, same index every step ->
                # stays resident, no re-fetch.
                pl.BlockSpec((1, D), lambda i: (0, 0)),
                # bias: scalar in SMEM (no lane-padded VMEM tile / per-step DMA).
                pl.BlockSpec(memory_space=pltpu.MemorySpace.SMEM),
            ],
            out_specs=pl.BlockSpec((TM, 1), lambda i: (i, 0)),
        ),
        compiler_params=pltpu.CompilerParams(
            dimension_semantics=("parallel",),
            vmem_limit_bytes=vmem_limit,
        ),
    )(x, weight, b2)

    return out if B_eff == B else out[:B]


if __name__ == "__main__":
    # --- Small shape consistent with the module spec -------------------------
    batch, input_dim = 8, 32

    key = jax.random.PRNGKey(0)
    kx, kw, kb = jax.random.split(key, 3)

    # nn.Linear-style init U(-1/sqrt(D), 1/sqrt(D)), deterministic.
    bound = 1.0 / jnp.sqrt(jnp.float32(input_dim))
    weight = jax.random.uniform(kw, (1, input_dim), jnp.float32, -bound, bound)
    bias = jax.random.uniform(kb, (1,), jnp.float32, -bound, bound)
    x = jax.random.normal(kx, (batch, input_dim), jnp.float32)

    out = linear_regression_forward(x, weight, bias)
    out = jax.block_until_ready(out)

    ref = x @ weight.T + bias
    assert out.shape == (batch, 1)
    assert jnp.allclose(out, ref, atol=1e-5, rtol=1e-5)

    # --- Exercise the multi-step grid + ragged edge block (TM does not divide B)
    B2, D2 = 600, 256
    k2x, k2w, k2b = jax.random.split(jax.random.PRNGKey(1), 3)
    bound2 = 1.0 / jnp.sqrt(jnp.float32(D2))
    w2 = jax.random.uniform(k2w, (1, D2), jnp.float32, -bound2, bound2)
    b2 = jax.random.uniform(k2b, (1,), jnp.float32, -bound2, bound2)
    x2 = jax.random.normal(k2x, (B2, D2), jnp.float32)

    out2 = jax.block_until_ready(linear_regression_forward(x2, w2, b2))
    ref2 = x2 @ w2.T + b2
    assert out2.shape == (B2, 1)
    assert jnp.allclose(out2, ref2, atol=1e-4, rtol=1e-5)

    print("KERNEL_OK")
</pallas_src>

<mosaic_0001>
module attributes {stable_mosaic.version = 11 : i64} {
  func.func @_linear_kernel(%arg0: i32, %arg1: memref<8x32xf32, #tpu.memory_space<vmem>>, %arg2: memref<1x32xf32, #tpu.memory_space<vmem>>, %arg3: memref<1x1xf32, #tpu.memory_space<smem>>, %arg4: memref<8x1xf32, #tpu.memory_space<vmem>>) attributes {dimension_semantics = [#tpu.dimension_semantics<parallel>], iteration_bounds = array<i64: 1>, scalar_prefetch = 0 : i64, scratch_operands = 0 : i64, tpu.core_type = #tpu.core_type<tc>, window_params = [{transform_indices = @transform_0, window_bounds = array<i64: 8, 32>}, {pipeline_mode = #tpu.pipeline_mode<synchronous>, transform_indices = @transform_1, window_bounds = array<i64: 1, 32>}, {transform_indices = @transform_2, window_bounds = array<i64: 1, 1>}, {transform_indices = @transform_3, window_bounds = array<i64: 8, 1>}]} {
    %c0 = arith.constant 0 : index
    %c0_0 = arith.constant 0 : index
    %0 = vector.load %arg1[%c0, %c0_0] : memref<8x32xf32, #tpu.memory_space<vmem>>, vector<8x32xf32>
    %c0_1 = arith.constant 0 : index
    %c0_2 = arith.constant 0 : index
    %1 = vector.load %arg2[%c0_1, %c0_2] : memref<1x32xf32, #tpu.memory_space<vmem>>, vector<1x32xf32>
    %2 = vector.broadcast %1 : vector<1x32xf32> to vector<8x32xf32>
    %3 = arith.mulf %0, %2 : vector<8x32xf32>
    %cst = arith.constant dense<0.000000e+00> : vector<8xf32>
    %4 = vector.multi_reduction <add>, %3, %cst [1] : vector<8x32xf32> to vector<8xf32>
    %5 = vector.shape_cast %4 : vector<8xf32> to vector<8x1xf32>
    %c0_3 = arith.constant 0 : index
    %c0_4 = arith.constant 0 : index
    %6 = memref.load %arg3[%c0_3, %c0_4] : memref<1x1xf32, #tpu.memory_space<smem>>
    %7 = vector.broadcast %6 : f32 to vector<8x1xf32>
    %8 = arith.addf %5, %7 : vector<8x1xf32>
    %c0_5 = arith.constant 0 : index
    %c0_6 = arith.constant 0 : index
    %9 = vector.load %arg4[%c0_5, %c0_6] : memref<8x1xf32, #tpu.memory_space<vmem>>, vector<8x1xf32>
    tpu.vector_store %arg4[%c0_5, %c0_6], %8 {strides = array<i32>} : memref<8x1xf32, #tpu.memory_space<vmem>>, vector<8x1xf32>,
    return
  }
  func.func @transform_0(%arg0: i32) -> (i32, i32) {
    %c0_i32 = arith.constant 0 : i32
    %c0_i32_0 = arith.constant 0 : i32
    return %arg0, %c0_i32 : i32, i32
  }
  func.func @transform_1(%arg0: i32) -> (i32, i32) {
    %c0_i32 = arith.constant 0 : i32
    %c0_i32_0 = arith.constant 0 : i32
    %c0_i32_1 = arith.constant 0 : i32
    return %c0_i32, %c0_i32_0 : i32, i32
  }
  func.func @transform_2(%arg0: i32) -> (i32, i32) {
    %c0_i32 = arith.constant 0 : i32
    %c0_i32_0 = arith.constant 0 : i32
    %c0_i32_1 = arith.constant 0 : i32
    return %c0_i32, %c0_i32_0 : i32, i32
  }
  func.func @transform_3(%arg0: i32) -> (i32, i32) {
    %c0_i32 = arith.constant 0 : i32
    %c0_i32_0 = arith.constant 0 : i32
    return %arg0, %c0_i32 : i32, i32
  }
}

</mosaic_0001>

<llo_original>
// kernel: tpu_custom_call.1
$region0: #{tpu_custom_call.1}
  #allocation0 [shape = 'u32[]', space=smem, size = 0x4, offset = 0x4, fixed_abs, tag = 'smem constant byte address 0x4 - core index']
  #allocation1 [shape = 'u32[144,128]{1,0:T(1,128)}', space=vmem, size = 0x12000, scoped, tag = 'internal scratch']
  #allocation2 [shape = 'f32[1,1]{1,0:T(1,128)S(6)}', space=smem, size = 0x200, scoped, tag = 'scoped memory for tpu_custom_call.1']
  %s0 = inlined_call_operand.hbm [shape: f32[8,32], index: 0, kind: input, shape index: {}]
  %s1 = inlined_call_operand.vmem [shape: f32[1,32], index: 1, kind: input, shape index: {}]
  %s2 = inlined_call_operand.<no memory space> [shape: f32[1,1], index: 2, kind: input, shape index: {}]
  %s3 = inlined_call_operand.vmem [shape: f32[8,1], index: 3, kind: output, shape index: {}]
  %s4 = sld [smem:[#allocation0]]
  $region26: #{tpu_custom_call.1} parent=0
    _
  %s6 = ssub.s32 1, %s4
  %s7 = scalar_select 0, %s6, %s4
  %8 = sst [smem:[#allocation2]] %s2
  $region1: #{tpu_custom_call.1} parent=0
    #allocation3 [shape = 'u8[4096]{0}', space=vmem, size = 0x1000, scoped, tag = 'input window, operand 0, single buffered']
    #allocation4 [shape = 's32[1]{0}', space=sflag, size = 0x4, scoped, tag = 'scoped memory for tpu_custom_call.1']
    %9 = vsyncpa [#allocation4], 0
    // Predicated region
    $region2: #{tpu_custom_call.1} parent=1 // pred_check
      _
    $region3: #{tpu_custom_call.1} parent=1 // pred_check_branch
      %11 = sbr.rel (0) target = $region5
    $region4: #{tpu_custom_call.1} parent=1 // pred_region
      %s13 = ssub.s32 128, 128
      %14 = vsyncadd [#allocation4], %s13
      %s16 = sshll.u32 [#allocation3], 4
      %s17 = int_to_ptr.vmem [resolvable:$true] %s16
      %19 = dma.hbm_to_vmem [thread:$0]  %s0, 128, %s17, [#allocation4]
    $region5: #{tpu_custom_call.1} parent=1 // pred_fallthru
      _
    // Predicated region
    $region6: #{tpu_custom_call.1} parent=1 // pred_check
      _
    $region7: #{tpu_custom_call.1} parent=1 // pred_check_branch
      %21 = sbr.rel (0) target = $region9
    $region8: #{tpu_custom_call.1} parent=1 // pred_region
      _
    $region9: #{tpu_custom_call.1} parent=1 // pred_fallthru
      _
    // Predicated region
    $region10: #{tpu_custom_call.1} parent=1 // pred_check
      _
    $region11: #{tpu_custom_call.1} parent=1 // pred_check_branch
      %23 = sbr.rel (0) target = $region13
    $region12: #{tpu_custom_call.1} parent=1 // pred_region
      _
    $region13: #{tpu_custom_call.1} parent=1 // pred_fallthru
      _
    // Predicated region
    $region14: #{tpu_custom_call.1} parent=1 // pred_check
      _
    $region15: #{tpu_custom_call.1} parent=1 // pred_check_branch
      %25 = sbr.rel (0) target = $region17
    $region16: #{tpu_custom_call.1} parent=1 // pred_region
      %26 = dma.done [#allocation4], 128
    $region17: #{tpu_custom_call.1} parent=1 // pred_fallthru
      _
    %v27 = vld [vmem:[#allocation3] sm:$0xff]
    %v28 = vld [vmem:[%s1] sm:$0x1]
    %v30 = vlaneseq
    %v31 = vshrl.u32 %v30, 7
    %v32 = vsub.s32 0, %v31
    %v33 = vrot.slane %v28, %v32
    %v35 = vmul.f32 %v27, %v33
    %vm36 = vcmask 261120
    %v37 = vsel %vm36, %v35, 0.0
    %38 = vadd.xlane.f32.xlu0 %v37
    %v39 = vpop.xlane.xlu0 %38
    %s40 = sld [smem:[#allocation2]]
    %v41 = vstv %s40
    %v42 = vadd.f32 %v39, %v41
    %vm43 = vcmask 7168
    %44 = vst.msk [vmem:[%s3] sm:$0xff] %vm43, %v42
    // Predicated region
    $region18: #{tpu_custom_call.1} parent=1 // pred_check
      _
    $region19: #{tpu_custom_call.1} parent=1 // pred_check_branch
      %46 = sbr.rel (0) target = $region21
    $region20: #{tpu_custom_call.1} parent=1 // pred_region
      _
    $region21: #{tpu_custom_call.1} parent=1 // pred_fallthru
      _
    // Predicated region
    $region22: #{tpu_custom_call.1} parent=1 // pred_check
      _
    $region23: #{tpu_custom_call.1} parent=1 // pred_check_branch
      %48 = sbr.rel (0) target = $region25
    $region24: #{tpu_custom_call.1} parent=1 // pred_region
      _
    $region25: #{tpu_custom_call.1} parent=1 // pred_fallthru
      _
    %49 = vsyncpa [#allocation4], 1

</llo_original>
